<compile_context>
chip_gen: v7x
topology: tpu7x:2x2x1
jax: 0.10.0
libtpu: 0.0.40
codegen_flags: <defaults>
</compile_context>

<pallas_src>
import jax
import jax.numpy as jnp
from jax.experimental import pallas as pl
from jax.experimental.pallas import tpu as pltpu


_BLOCK_BYTE_BUDGET = 4 << 20   # ~4 MiB/block: DMA time >> 0.35 us per-step overhead
_VMEM_FLOOR_BYTES = 32 << 20   # cover in/out double buffers on v5e (16 MiB default)


def _round_up(v, m):
    return ((v + m - 1) // m) * m


def _device_kind():
    try:
        return jax.devices()[0].device_kind.lower()
    except Exception:
        return ""


def _prompt_add_kernel(x_ref, patch_ref, o_ref):
    # One VPU add per vreg with 1:1 load/store -- the kernel body is irrelevant
    # to performance; everything is DMA / step-count bound.
    o_ref[...] = x_ref[...] + patch_ref[...]


def fixed_patch_prompter(x, patch):
    """x: (B, C, H, W); patch: (1, C, P, P). Returns x + zero-padded top-left patch.

    Only the top Pr rows of each image are streamed through VMEM; the rest of
    the output aliases the input buffer (zero extra HBM traffic when x is
    donated under jit; otherwise XLA adds one copy and the result is still
    correct).
    """
    B, C, H, W = x.shape
    P = patch.shape[2]
    itemsize = x.dtype.itemsize

    # Sublane packing per dtype: 8 rows (f32), 16 (bf16/f16), 32 (int8/fp8).
    sub = 8 * max(1, 4 // itemsize)
    Pr = min(_round_up(P, sub), H)

    # Zero-pad the learnable patch once (wrapper side) into a (1, C, Pr, W) slab.
    patch_padded = (
        jnp.zeros((1, C, Pr, W), dtype=x.dtype)
        .at[:, :, :P, :P]
        .set(patch.astype(x.dtype))
    )

    per_image_bytes = C * Pr * W * itemsize
    kind = _device_kind()
    is_v7x = ("v7" in kind) or ("7x" in kind)

    # --- Batch tile straight from the byte budget (no divisor requirement). ---
    bt_cap = max(1, min(B, _BLOCK_BYTE_BUDGET // max(per_image_bytes, 1)))
    # Prefer a nearby divisor of B (costs at most 2x more steps) so the last
    # block is not ragged when that's cheap; otherwise accept a ragged (masked)
    # last block.
    Bt = bt_cap
    for d in range(bt_cap, max(1, bt_cap // 2) - 1, -1):
        if B % d == 0:
            Bt = d
            break
    steps = pl.cdiv(B, Bt)

    # v7x only: even number of >= 2 steps so both TensorCores get equal work.
    # Single-TC chips keep a single resident step when the touched region fits.
    if is_v7x and B >= 2 and (steps < 2 or steps % 2 == 1):
        target = max(2, steps + (steps % 2))
        Bt = max(1, pl.cdiv(B, target))
        steps = pl.cdiv(B, Bt)

    block_bytes = Bt * per_image_bytes
    # in + out double buffers + resident patch slab + margin; floor at 32 MiB so
    # large blocks also clear v5e's 16 MiB default scoped-VMEM limit.
    vmem_limit = int(
        max(4 * block_bytes + 2 * per_image_bytes + (2 << 20), _VMEM_FLOOR_BYTES)
    )

    compiler_params = pltpu.CompilerParams(
        dimension_semantics=("parallel",),
        vmem_limit_bytes=vmem_limit,
    )

    Lr = Pr * W
    lane_dense = (Pr == H) or (Lr % 128 == 0)

    if lane_dense:
        # Metadata-only reshape: block last dim = Pr*W is lane-dense (multiple
        # of 128 or the full spatial extent) -> unmasked full-width stores and
        # one contiguous run per (image, channel) DMA.
        x_flat = x.reshape(B, C, H * W)
        patch_flat = patch_padded.reshape(1, C, Lr)
        out = pl.pallas_call(
            _prompt_add_kernel,
            out_shape=jax.ShapeDtypeStruct((B, C, H * W), x.dtype),
            grid=(steps,),
            in_specs=[
                pl.BlockSpec((Bt, C, Lr), lambda b: (b, 0, 0)),
                pl.BlockSpec((1, C, Lr), lambda b: (0, 0, 0)),
            ],
            out_specs=pl.BlockSpec((Bt, C, Lr), lambda b: (b, 0, 0)),
            # Output aliases x: spatial elements >= Pr*W of every (image,
            # channel) are never written by the kernel and keep the input
            # pixel values.
            input_output_aliases={0: 0},
            compiler_params=compiler_params,
        )(x_flat, patch_flat)
        return out.reshape(B, C, H, W)

    # Fallback: 4-D blocks (W is the full last dim, so the BlockSpec is always
    # legal even when Pr*W is not a multiple of 128).
    return pl.pallas_call(
        _prompt_add_kernel,
        out_shape=jax.ShapeDtypeStruct((B, C, H, W), x.dtype),
        grid=(steps,),
        in_specs=[
            pl.BlockSpec((Bt, C, Pr, W), lambda b: (b, 0, 0, 0)),
            pl.BlockSpec((1, C, Pr, W), lambda b: (0, 0, 0, 0)),
        ],
        out_specs=pl.BlockSpec((Bt, C, Pr, W), lambda b: (b, 0, 0, 0)),
        input_output_aliases={0: 0},
        compiler_params=compiler_params,
    )(x, patch_padded)


if __name__ == "__main__":
    # Small deterministic shapes consistent with the module:
    # image_size = 16, prompt_size = 4, 3 channels (hard-coded), batch = 2.
    B, C, H, P = 2, 3, 16, 4
    key = jax.random.PRNGKey(0)
    kx, kp = jax.random.split(key)

    x = jax.random.normal(kx, (B, C, H, H), dtype=jnp.float32)
    patch = jax.random.normal(kp, (1, C, P, P), dtype=jnp.float32)

    # Pure-JAX reference, computed BEFORE x is donated to the kernel call.
    prompt = jnp.zeros((1, C, H, H), dtype=jnp.float32).at[:, :, :P, :P].set(patch)
    ref = x + prompt

    # Donate x so the aliased, untouched bulk of each image never makes an
    # extra HBM round trip (without donation the result is still correct; XLA
    # merely inserts one defensive copy of x to materialize the alias).
    f = jax.jit(fixed_patch_prompter, donate_argnums=(0,))
    out = jax.block_until_ready(f(x, patch))

    assert out.shape == (B, C, H, H) and out.dtype == jnp.float32
    assert jnp.allclose(out, ref, atol=1e-6, rtol=1e-6)

    print("KERNEL_OK")
</pallas_src>

<mosaic_0001>
module attributes {stable_mosaic.version = 11 : i64} {
  func.func @_prompt_add_kernel(%arg0: i32, %arg1: memref<2x3x128xf32, #tpu.memory_space<vmem>>, %arg2: memref<1x3x128xf32, #tpu.memory_space<vmem>>, %arg3: memref<2x3x128xf32, #tpu.memory_space<vmem>>) attributes {dimension_semantics = [#tpu.dimension_semantics<parallel>], iteration_bounds = array<i64: 1>, scalar_prefetch = 0 : i64, scratch_operands = 0 : i64, tpu.core_type = #tpu.core_type<tc>, window_params = [{transform_indices = @transform_0, window_bounds = array<i64: 2, 3, 128>}, {pipeline_mode = #tpu.pipeline_mode<synchronous>, transform_indices = @transform_1, window_bounds = array<i64: 1, 3, 128>}, {transform_indices = @transform_2, window_bounds = array<i64: 2, 3, 128>}]} {
    %c0 = arith.constant 0 : index
    %c0_0 = arith.constant 0 : index
    %c0_1 = arith.constant 0 : index
    %0 = vector.load %arg1[%c0, %c0_0, %c0_1] : memref<2x3x128xf32, #tpu.memory_space<vmem>>, vector<2x3x128xf32>
    %c0_2 = arith.constant 0 : index
    %c0_3 = arith.constant 0 : index
    %c0_4 = arith.constant 0 : index
    %1 = vector.load %arg2[%c0_2, %c0_3, %c0_4] : memref<1x3x128xf32, #tpu.memory_space<vmem>>, vector<1x3x128xf32>
    %2 = vector.broadcast %1 : vector<1x3x128xf32> to vector<2x3x128xf32>
    %3 = arith.addf %0, %2 : vector<2x3x128xf32>
    %c0_5 = arith.constant 0 : index
    %c0_6 = arith.constant 0 : index
    %c0_7 = arith.constant 0 : index
    %4 = vector.load %arg3[%c0_5, %c0_6, %c0_7] : memref<2x3x128xf32, #tpu.memory_space<vmem>>, vector<2x3x128xf32>
    tpu.vector_store %arg3[%c0_5, %c0_6, %c0_7], %3 {strides = array<i32>} : memref<2x3x128xf32, #tpu.memory_space<vmem>>, vector<2x3x128xf32>,
    return
  }
  func.func @transform_0(%arg0: i32) -> (i32, i32, i32) {
    %c0_i32 = arith.constant 0 : i32
    %c0_i32_0 = arith.constant 0 : i32
    %c0_i32_1 = arith.constant 0 : i32
    return %arg0, %c0_i32, %c0_i32_0 : i32, i32, i32
  }
  func.func @transform_1(%arg0: i32) -> (i32, i32, i32) {
    %c0_i32 = arith.constant 0 : i32
    %c0_i32_0 = arith.constant 0 : i32
    %c0_i32_1 = arith.constant 0 : i32
    %c0_i32_2 = arith.constant 0 : i32
    return %c0_i32, %c0_i32_0, %c0_i32_1 : i32, i32, i32
  }
  func.func @transform_2(%arg0: i32) -> (i32, i32, i32) {
    %c0_i32 = arith.constant 0 : i32
    %c0_i32_0 = arith.constant 0 : i32
    %c0_i32_1 = arith.constant 0 : i32
    return %arg0, %c0_i32, %c0_i32_0 : i32, i32, i32
  }
}

</mosaic_0001>

<llo_original>
// kernel: fixed_patch_prompter.1
$region0: #{fixed_patch_prompter.1}
  #allocation0 [shape = 'u32[]', space=smem, size = 0x4, offset = 0x4, fixed_abs, tag = 'smem constant byte address 0x4 - core index']
  #allocation1 [shape = 'u32[144,128]{1,0:T(1,128)}', space=vmem, size = 0x12000, scoped, tag = 'internal scratch']
  %s0 = inlined_call_operand.vmem [shape: f32[2,3,256], index: 0, kind: input, shape index: {}, may-alias: {0,2}]
  %s1 = inlined_call_operand.vmem [shape: f32[1,3,128], index: 1, kind: input, shape index: {}]
  %s2 = inlined_call_operand.vmem [shape: f32[2,3,256], index: 2, kind: output, shape index: {}, may-alias: {0,2}]
  %s3 = sld [smem:[#allocation0]]
  $region96: #{fixed_patch_prompter.1} parent=0
    _
  %s5 = ssub.s32 1, %s3
  %s6 = scalar_select 0, %s5, %s3
  $region1: #{fixed_patch_prompter.1} parent=0
    #allocation2 [shape = 'u8[4096]{0}', space=vmem, size = 0x1000, scoped, tag = 'input window, operand 0, single buffered']
    #allocation3 [shape = 'u8[4096]{0}', space=vmem, size = 0x1000, scoped, tag = 'output window, operand 0, single buffered']
    // Predicated region
    $region2: #{fixed_patch_prompter.1} parent=1 // pred_check
      _
    $region3: #{fixed_patch_prompter.1} parent=1 // pred_check_branch
      %8 = sbr.rel (0) target = $region5
    $region4: #{fixed_patch_prompter.1} parent=1 // pred_region
      // Predicated region
      $region6: #{fixed_patch_prompter.1} parent=4 // pred_check
        _
      $region7: #{fixed_patch_prompter.1} parent=4 // pred_check_branch
        %10 = sbr.rel (0) target = $region9
      $region8: #{fixed_patch_prompter.1} parent=4 // pred_region
        // Predicated region
        $region10: #{fixed_patch_prompter.1} parent=8 // pred_check
          _
        $region11: #{fixed_patch_prompter.1} parent=8 // pred_check_branch
          %12 = sbr.rel target = $region13
        $region12: #{fixed_patch_prompter.1} parent=8 // pred_region
          // Predicated region
          $region25: #{fixed_patch_prompter.1} parent=12 // pred_check
            _
          $region26: #{fixed_patch_prompter.1} parent=12 // pred_check_branch
            %29 = sbr.rel (0) target = $region28
          $region27: #{fixed_patch_prompter.1} parent=12 // pred_region
            loop: start=0, step=1, limit=1
            $region29: #{fixed_patch_prompter.1} parent=27 // loop_pre_header
              _
            $region30: #{fixed_patch_prompter.1} parent=27 // loop_header
              %s31 = sphi 0, %s35
              %p32 = scmp.ge.s32.totalorder %s31, 1
              %s36 = sphi %s0, %s0
              %s37 = sphi [#allocation2], [#allocation2]
            $region31: #{fixed_patch_prompter.1} parent=27 // loop_header_branch
              %34 = sbr.rel (%p32) target = $region35
            $region32: #{fixed_patch_prompter.1} parent=27 // loop_body
              _
            $region33: #{fixed_patch_prompter.1} parent=27 // loop_footer
              %s35 = sadd.s32 1, %s31
            $region34: #{fixed_patch_prompter.1} parent=27 // loop_footer_branch
              %30 = sbr.rel target = $region30
            $region35: #{fixed_patch_prompter.1} parent=27 // loop_exit
              _
            loop: start=0, step=1, limit=1
            $region36: #{fixed_patch_prompter.1} parent=27 // loop_pre_header
              _
            $region37: #{fixed_patch_prompter.1} parent=27 // loop_header
              %s40 = sphi 0, %s44
              %p41 = scmp.ge.s32.totalorder %s40, 1
              %s45 = sphi %s0, %s0
              %s46 = sphi [#allocation2], [#allocation2]
            $region38: #{fixed_patch_prompter.1} parent=27 // loop_header_branch
              %43 = sbr.rel (%p41) target = $region42
            $region39: #{fixed_patch_prompter.1} parent=27 // loop_body
              %v47 = vld [vmem:[%s45] sm:$0xf]
              %48 = vst [vmem:[%s46] sm:$0xf] %v47
              %v49 = vld [vmem:[%s45 + $0x8] sm:$0xf]
              %50 = vst [vmem:[%s46 + $0x4] sm:$0xf] %v49
            $region40: #{fixed_patch_prompter.1} parent=27 // loop_footer
              %s44 = sadd.s32 1, %s40
            $region41: #{fixed_patch_prompter.1} parent=27 // loop_footer_branch
              %39 = sbr.rel target = $region37
            $region42: #{fixed_patch_prompter.1} parent=27 // loop_exit
              _
          $region28: #{fixed_patch_prompter.1} parent=12 // pred_fallthru
            _
        $region13: #{fixed_patch_prompter.1} parent=8 // pred_fallthru
          _
        // Predicated region
        $region14: #{fixed_patch_prompter.1} parent=8 // pred_check
          _
        $region15: #{fixed_patch_prompter.1} parent=8 // pred_check_branch
          %14 = sbr.rel (0) target = $region17
        $region16: #{fixed_patch_prompter.1} parent=8 // pred_region
          loop: start=0, step=1, limit=1
          $region18: #{fixed_patch_prompter.1} parent=16 // loop_pre_header
            _
          $region19: #{fixed_patch_prompter.1} parent=16 // loop_header
            %s17 = sphi 0, %s21
            %p18 = scmp.ge.s32.totalorder %s17, 1
            %s22 = sphi %s0, %s0
            %s23 = sphi [#allocation2], [#allocation2]
          $region20: #{fixed_patch_prompter.1} parent=16 // loop_header_branch
            %20 = sbr.rel (%p18) target = $region24
          $region21: #{fixed_patch_prompter.1} parent=16 // loop_body
            %v24 = vld [vmem:[%s22] sm:$0xf]
            %25 = vst [vmem:[%s23] sm:$0xf] %v24
            %v26 = vld [vmem:[%s22 + $0x8] sm:$0xf]
            %27 = vst [vmem:[%s23 + $0x4] sm:$0xf] %v26
          $region22: #{fixed_patch_prompter.1} parent=16 // loop_footer
            %s21 = sadd.s32 1, %s17
          $region23: #{fixed_patch_prompter.1} parent=16 // loop_footer_branch
            %16 = sbr.rel target = $region19
          $region24: #{fixed_patch_prompter.1} parent=16 // loop_exit
            _
        $region17: #{fixed_patch_prompter.1} parent=8 // pred_fallthru
          _
      $region9: #{fixed_patch_prompter.1} parent=4 // pred_fallthru
        _
      %51 = vnop
    $region5: #{fixed_patch_prompter.1} parent=1 // pred_fallthru
      _
    // Predicated region
    $region43: #{fixed_patch_prompter.1} parent=1 // pred_check
      _
    $region44: #{fixed_patch_prompter.1} parent=1 // pred_check_branch
      %53 = sbr.rel (0) target = $region46
    $region45: #{fixed_patch_prompter.1} parent=1 // pred_region
      _
    $region46: #{fixed_patch_prompter.1} parent=1 // pred_fallthru
      _
    // Predicated region
    $region47: #{fixed_patch_prompter.1} parent=1 // pred_check
      _
    $region48: #{fixed_patch_prompter.1} parent=1 // pred_check_branch
      %55 = sbr.rel (0) target = $region50
    $region49: #{fixed_patch_prompter.1} parent=1 // pred_region
      _
    $region50: #{fixed_patch_prompter.1} parent=1 // pred_fallthru
      _
    %v56 = vld [vmem:[#allocation2] sm:$0x7]
    %v57 = vld [vmem:[#allocation2 + $0x4] sm:$0x7]
    %v58 = vld [vmem:[%s1] sm:$0x7]
    %v59 = vadd.f32 %v56, %v58
    %v60 = vadd.f32 %v57, %v58
    %61 = vst [vmem:[#allocation3] sm:$0x7] %v59
    %62 = vst [vmem:[#allocation3 + $0x4] sm:$0x7] %v60
    // Predicated region
    $region51: #{fixed_patch_prompter.1} parent=1 // pred_check
      _
    $region52: #{fixed_patch_prompter.1} parent=1 // pred_check_branch
      %64 = sbr.rel (0) target = $region54
    $region53: #{fixed_patch_prompter.1} parent=1 // pred_region
      // Predicated region
      $region55: #{fixed_patch_prompter.1} parent=53 // pred_check
        _
      $region56: #{fixed_patch_prompter.1} parent=53 // pred_check_branch
        %66 = sbr.rel (0) target = $region58
      $region57: #{fixed_patch_prompter.1} parent=53 // pred_region
        // Predicated region
        $region59: #{fixed_patch_prompter.1} parent=57 // pred_check
          _
        $region60: #{fixed_patch_prompter.1} parent=57 // pred_check_branch
          %68 = sbr.rel target = $region62
        $region61: #{fixed_patch_prompter.1} parent=57 // pred_region
          // Predicated region
          $region74: #{fixed_patch_prompter.1} parent=61 // pred_check
            _
          $region75: #{fixed_patch_prompter.1} parent=61 // pred_check_branch
            %85 = sbr.rel (0) target = $region77
          $region76: #{fixed_patch_prompter.1} parent=61 // pred_region
            loop: start=0, step=1, limit=1
            $region78: #{fixed_patch_prompter.1} parent=76 // loop_pre_header
              _
            $region79: #{fixed_patch_prompter.1} parent=76 // loop_header
              %s87 = sphi 0, %s91
              %p88 = scmp.ge.s32.totalorder %s87, 1
              %s92 = sphi [#allocation3], [#allocation3]
              %s93 = sphi %s2, %s2
            $region80: #{fixed_patch_prompter.1} parent=76 // loop_header_branch
              %90 = sbr.rel (%p88) target = $region84
            $region81: #{fixed_patch_prompter.1} parent=76 // loop_body
              _
            $region82: #{fixed_patch_prompter.1} parent=76 // loop_footer
              %s91 = sadd.s32 1, %s87
            $region83: #{fixed_patch_prompter.1} parent=76 // loop_footer_branch
              %86 = sbr.rel target = $region79
            $region84: #{fixed_patch_prompter.1} parent=76 // loop_exit
              _
            loop: start=0, step=1, limit=1
            $region85: #{fixed_patch_prompter.1} parent=76 // loop_pre_header
              _
            $region86: #{fixed_patch_prompter.1} parent=76 // loop_header
              %s96 = sphi 0, %s100
              %p97 = scmp.ge.s32.totalorder %s96, 1
              %s101 = sphi [#allocation3], [#allocation3]
              %s102 = sphi %s2, %s2
            $region87: #{fixed_patch_prompter.1} parent=76 // loop_header_branch
              %99 = sbr.rel (%p97) target = $region91
            $region88: #{fixed_patch_prompter.1} parent=76 // loop_body
              %v103 = vld [vmem:[%s101] sm:$0xf]
              %104 = vst [vmem:[%s102] sm:$0xf] %v103
              %v105 = vld [vmem:[%s101 + $0x4] sm:$0xf]
              %106 = vst [vmem:[%s102 + $0x8] sm:$0xf] %v105
            $region89: #{fixed_patch_prompter.1} parent=76 // loop_footer
              %s100 = sadd.s32 1, %s96
            $region90: #{fixed_patch_prompter.1} parent=76 // loop_footer_branch
              %95 = sbr.rel target = $region86
            $region91: #{fixed_patch_prompter.1} parent=76 // loop_exit
              _
          $region77: #{fixed_patch_prompter.1} parent=61 // pred_fallthru
            _
        $region62: #{fixed_patch_prompter.1} parent=57 // pred_fallthru
          _
        // Predicated region
        $region63: #{fixed_patch_prompter.1} parent=57 // pred_check
          _
        $region64: #{fixed_patch_prompter.1} parent=57 // pred_check_branch
          %70 = sbr.rel (0) target = $region66
        $region65: #{fixed_patch_prompter.1} parent=57 // pred_region
          loop: start=0, step=1, limit=1
          $region67: #{fixed_patch_prompter.1} parent=65 // loop_pre_header
            _
          $region68: #{fixed_patch_prompter.1} parent=65 // loop_header
            %s73 = sphi 0, %s77
            %p74 = scmp.ge.s32.totalorder %s73, 1
            %s78 = sphi [#allocation3], [#allocation3]
            %s79 = sphi %s2, %s2
          $region69: #{fixed_patch_prompter.1} parent=65 // loop_header_branch
            %76 = sbr.rel (%p74) target = $region73
          $region70: #{fixed_patch_prompter.1} parent=65 // loop_body
            %v80 = vld [vmem:[%s78] sm:$0xf]
            %81 = vst [vmem:[%s79] sm:$0xf] %v80
            %v82 = vld [vmem:[%s78 + $0x4] sm:$0xf]
            %83 = vst [vmem:[%s79 + $0x8] sm:$0xf] %v82
          $region71: #{fixed_patch_prompter.1} parent=65 // loop_footer
            %s77 = sadd.s32 1, %s73
          $region72: #{fixed_patch_prompter.1} parent=65 // loop_footer_branch
            %72 = sbr.rel target = $region68
          $region73: #{fixed_patch_prompter.1} parent=65 // loop_exit
            _
        $region66: #{fixed_patch_prompter.1} parent=57 // pred_fallthru
          _
      $region58: #{fixed_patch_prompter.1} parent=53 // pred_fallthru
        _
      %107 = vnop
    $region54: #{fixed_patch_prompter.1} parent=1 // pred_fallthru
      _
    // Predicated region
    $region92: #{fixed_patch_prompter.1} parent=1 // pred_check
      _
    $region93: #{fixed_patch_prompter.1} parent=1 // pred_check_branch
      %109 = sbr.rel (0) target = $region95
    $region94: #{fixed_patch_prompter.1} parent=1 // pred_region
      _
    $region95: #{fixed_patch_prompter.1} parent=1 // pred_fallthru
      _

</llo_original>
